<compile_context>
chip_gen: v5e
topology: v5e:2x2
jax: 0.10.0
libtpu: 0.0.40
codegen_flags: <defaults>
</compile_context>

<pallas_src>
import jax
import jax.numpy as jnp
from jax.experimental import pallas as pl
from jax.experimental.pallas import tpu as pltpu


# Per board, per input the VMEM tile is a (1, S2)->(8, 128) f32 slab = 4 KiB.
# 2 inputs x 2 pipeline buffers -> 16 KiB/board, so TB=1024 is ~16 MiB: safely
# under the 32 MiB scoped-VMEM default on v6e/v7x with room for the output.
_MAX_TB = 1024


def _wnet_q_kernel(ch1_ref, ch2_ref, value_ref):
    """ch1_ref / ch2_ref: (TB, 1, 1, S2) float32 views of channels 1 and 2 of
    the original (B, 5, 1, S2) board tensor (DMA'd straight from HBM — no
    wrapper copies).  value_ref: (TB, 1) int32 = per-board any(ch2==1 & ch1==1).
    """
    c1 = ch1_ref[:, 0, 0, :]                      # (TB, S2) f32
    c2 = ch2_ref[:, 0, 0, :]
    hit = jnp.logical_and(c2 == 1.0, c1 == 1.0)   # VPU compare + and
    value_ref[...] = jnp.max(hit.astype(jnp.int32), axis=-1, keepdims=True)


def _num_tensorcores():
    """2 on dual-TC chips (v7x), else 1 (v5e / v6e / unknown)."""
    try:
        kind = jax.devices()[0].device_kind.lower()
    except Exception:
        return 1
    return 2 if "v7" in kind else 1


def _pick_batch_tile(B):
    """Batch tile: one big step on 1-TC chips / small batches; an even number
    of substantial (>=128 board) steps on v7x so both TCs stay balanced."""
    n_tc = _num_tensorcores()
    if B <= _MAX_TB and (n_tc == 1 or B < 256):
        # Serial grid (v5e/v6e) or too little work to shard: single step.
        return B
    if n_tc >= 2:
        # v7x: even step count, each step as large as the VMEM cap allows.
        steps = max(2, 2 * pl.cdiv(pl.cdiv(B, _MAX_TB), 2))
        tb = pl.cdiv(B, steps)
    else:
        tb = _MAX_TB
    # Multiple of 8 keeps the (TB, 1) int32 output block sublane-aligned.
    return min(_MAX_TB, max(8, ((tb + 7) // 8) * 8))


def wnet_q_forward_batched(xb, size=9):
    """Batched forward: xb is (B, 5, size, size) (or reshape-compatible).
    Returns (value (B,) int32, policy (size*size,) float32)."""
    B = xb.shape[0]
    S2 = size * size
    policy = jnp.full((S2,), 1.0 / S2, dtype=jnp.float32)  # constant, no kernel

    # Free contiguous reshape; channel stays a MIDDLE dim so the two channel-
    # selecting BlockSpecs keep last-two block dims == full array dims (legal).
    xb4 = jnp.asarray(xb).reshape(B, 5, 1, S2).astype(jnp.float32)

    TB = _pick_batch_tile(B)
    grid = (pl.cdiv(B, TB),)

    value = pl.pallas_call(
        _wnet_q_kernel,
        out_shape=jax.ShapeDtypeStruct((B, 1), jnp.int32),
        grid=grid,
        in_specs=[
            pl.BlockSpec((TB, 1, 1, S2), lambda b: (b, 1, 0, 0)),  # channel 1
            pl.BlockSpec((TB, 1, 1, S2), lambda b: (b, 2, 0, 0)),  # channel 2
        ],
        out_specs=pl.BlockSpec((TB, 1), lambda b: (b, 0)),
        compiler_params=pltpu.CompilerParams(
            dimension_semantics=("parallel",)),
    )(xb4, xb4)   # same operand twice: two views, one HBM buffer, no copies

    return value.reshape(B), policy


def wnet_q_forward(x, size=9):
    """Single-board forward matching WNET_Q.forward.

    value:  int32 shape (1,)
    policy: float32 shape (size*size,)
    """
    S2 = size * size
    policy = jnp.full((S2,), 1.0 / S2, dtype=jnp.float32)
    if x.shape[0] == 0:
        # Empty-input branch of the reference module: value stays 0.
        return jnp.zeros((1,), jnp.int32), policy
    value, _ = wnet_q_forward_batched(
        jnp.asarray(x).reshape(1, 5, size, size), size=size)
    return value.reshape(1), policy


def wnet_q_reference(x, size=9):
    """Plain-JAX reference for correctness checking (single board)."""
    S2 = size * size
    policy = jnp.full((S2,), 1.0 / S2, dtype=jnp.float32)
    xr = jnp.asarray(x).reshape(5, size, size)
    value = jnp.any(jnp.logical_and(xr[2] == 1.0, xr[1] == 1.0)).astype(jnp.int32)
    return value.reshape(1), policy


if __name__ == "__main__":
    size = 9
    root = jax.random.PRNGKey(0)
    k_single, k_batch = jax.random.split(root)

    # --- single-board path (module-exact API) -------------------------------
    x = jax.random.bernoulli(k_single, 0.2, (5, size, size)).astype(jnp.float32)
    value, policy = wnet_q_forward(x, size=size)
    jax.block_until_ready((value, policy))

    ref_value, ref_policy = wnet_q_reference(x, size=size)
    assert value.shape == (1,) and value.dtype == jnp.int32
    assert policy.shape == (size * size,) and policy.dtype == jnp.float32
    assert int(value[0]) == int(ref_value[0]), (value, ref_value)
    assert jnp.allclose(policy, ref_policy), "policy mismatch"

    # --- batched path (the performance-relevant entry point) ----------------
    B = 16
    xb = jax.random.bernoulli(
        k_batch, 0.1, (B, 5, size, size)).astype(jnp.float32)
    vb, pb = wnet_q_forward_batched(xb, size=size)
    jax.block_until_ready((vb, pb))

    ref_vb = jnp.any(
        jnp.logical_and(xb[:, 2] == 1.0, xb[:, 1] == 1.0), axis=(1, 2)
    ).astype(jnp.int32)
    assert vb.shape == (B,) and vb.dtype == jnp.int32
    assert jnp.array_equal(vb, ref_vb), (vb, ref_vb)
    assert jnp.allclose(pb, ref_policy), "batched policy mismatch"

    print("KERNEL_OK")
</pallas_src>

<mosaic_0001>
module attributes {stable_mosaic.version = 11 : i64} {
  func.func @_wnet_q_kernel(%arg0: i32, %arg1: memref<1x1x1x81xf32, #tpu.memory_space<vmem>>, %arg2: memref<1x1x1x81xf32, #tpu.memory_space<vmem>>, %arg3: memref<1x1xi32, #tpu.memory_space<vmem>>) attributes {dimension_semantics = [#tpu.dimension_semantics<parallel>], iteration_bounds = array<i64: 1>, scalar_prefetch = 0 : i64, scratch_operands = 0 : i64, tpu.core_type = #tpu.core_type<tc>, window_params = [{transform_indices = @transform_0, window_bounds = array<i64: 1, 1, 1, 81>}, {transform_indices = @transform_1, window_bounds = array<i64: 1, 1, 1, 81>}, {transform_indices = @transform_2, window_bounds = array<i64: 1, 1>}]} {
    %c0 = arith.constant 0 : index
    %c0_0 = arith.constant 0 : index
    %c0_1 = arith.constant 0 : index
    %c0_2 = arith.constant 0 : index
    %0 = vector.load %arg1[%c0, %c0_0, %c0_1, %c0_2] : memref<1x1x1x81xf32, #tpu.memory_space<vmem>>, vector<1x1x1x81xf32>
    %1 = vector.shape_cast %0 : vector<1x1x1x81xf32> to vector<1x81xf32>
    %c0_3 = arith.constant 0 : index
    %c0_4 = arith.constant 0 : index
    %c0_5 = arith.constant 0 : index
    %c0_6 = arith.constant 0 : index
    %2 = vector.load %arg2[%c0_3, %c0_4, %c0_5, %c0_6] : memref<1x1x1x81xf32, #tpu.memory_space<vmem>>, vector<1x1x1x81xf32>
    %3 = vector.shape_cast %2 : vector<1x1x1x81xf32> to vector<1x81xf32>
    %cst = arith.constant 1.000000e+00 : f32
    %4 = vector.broadcast %cst : f32 to vector<1x81xf32>
    %5 = arith.cmpf oeq, %3, %4 : vector<1x81xf32>
    %cst_7 = arith.constant 1.000000e+00 : f32
    %6 = vector.broadcast %cst_7 : f32 to vector<1x81xf32>
    %7 = arith.cmpf oeq, %1, %6 : vector<1x81xf32>
    %8 = arith.andi %5, %7 : vector<1x81xi1>
    %9 = arith.extui %8 : vector<1x81xi1> to vector<1x81xi32>
    %cst_8 = arith.constant dense<-2147483648> : vector<1xi32>
    %10 = vector.multi_reduction <maxsi>, %9, %cst_8 [1] : vector<1x81xi32> to vector<1xi32>
    %11 = vector.shape_cast %10 : vector<1xi32> to vector<1x1xi32>
    %c0_9 = arith.constant 0 : index
    %c0_10 = arith.constant 0 : index
    %12 = vector.load %arg3[%c0_9, %c0_10] : memref<1x1xi32, #tpu.memory_space<vmem>>, vector<1x1xi32>
    tpu.vector_store %arg3[%c0_9, %c0_10], %11 {strides = array<i32>} : memref<1x1xi32, #tpu.memory_space<vmem>>, vector<1x1xi32>,
    return
  }
  func.func @transform_0(%arg0: i32) -> (i32, i32, i32, i32) {
    %c1_i32 = arith.constant 1 : i32
    %c0_i32 = arith.constant 0 : i32
    %c0_i32_0 = arith.constant 0 : i32
    %c0_i32_1 = arith.constant 0 : i32
    return %arg0, %c1_i32, %c0_i32, %c0_i32_0 : i32, i32, i32, i32
  }
  func.func @transform_1(%arg0: i32) -> (i32, i32, i32, i32) {
    %c2_i32 = arith.constant 2 : i32
    %c0_i32 = arith.constant 0 : i32
    %c0_i32_0 = arith.constant 0 : i32
    %c0_i32_1 = arith.constant 0 : i32
    return %arg0, %c2_i32, %c0_i32, %c0_i32_0 : i32, i32, i32, i32
  }
  func.func @transform_2(%arg0: i32) -> (i32, i32) {
    %c0_i32 = arith.constant 0 : i32
    %c0_i32_0 = arith.constant 0 : i32
    return %arg0, %c0_i32 : i32, i32
  }
}

</mosaic_0001>

<llo_original>
// kernel: tpu_custom_call.1
$region0: #{tpu_custom_call.1}
  #allocation0 [shape = 'u32[]', space=smem, size = 0x4, offset = 0x4, fixed_abs, tag = 'smem constant byte address 0x4 - core index']
  #allocation1 [shape = 'u32[72,128]{1,0:T(1,128)}', space=vmem, size = 0x9000, scoped, tag = 'internal scratch']
  %s0 = inlined_call_operand.hbm [shape: f32[1,5,1,81], index: 0, kind: input, shape index: {}]
  %s1 = inlined_call_operand.hbm [shape: f32[1,5,1,81], index: 1, kind: input, shape index: {}]
  %s2 = inlined_call_operand.hbm [shape: s32[1,1], index: 2, kind: output, shape index: {}]
  %s3 = sld [smem:[#allocation0]]
  $region26: #{tpu_custom_call.1} parent=0
    _
  %s5 = ssub.s32 1, %s3
  %s6 = scalar_select 0, %s5, %s3
  $region1: #{tpu_custom_call.1} parent=0
    #allocation2 [shape = 'u8[512]{0}', space=vmem, size = 0x400, scoped, tag = 'input window, operand 0, single buffered']
    #allocation3 [shape = 's32[1]{0}', space=sflag, size = 0x4, scoped, tag = 'scoped memory for tpu_custom_call.1']
    #allocation4 [shape = 's32[1]{0}', space=sflag, size = 0x4, scoped, tag = 'scoped memory for tpu_custom_call.1']
    #allocation5 [shape = 'u8[512]{0}', space=vmem, size = 0x400, scoped, tag = 'input window, operand 1, single buffered']
    #allocation6 [shape = 's32[1]{0}', space=sflag, size = 0x4, scoped, tag = 'scoped memory for tpu_custom_call.1']
    #allocation7 [shape = 'u8[512]{0}', space=vmem, size = 0x400, scoped, tag = 'output window, operand 0, single buffered']
    %7 = vsyncpa [#allocation3], 0
    %8 = vsyncpa [#allocation6], 0
    %9 = vsyncpa [#allocation4], 0
    // Predicated region
    $region2: #{tpu_custom_call.1} parent=1 // pred_check
      _
    $region3: #{tpu_custom_call.1} parent=1 // pred_check_branch
      %11 = sbr.rel (0) target = $region5
    $region4: #{tpu_custom_call.1} parent=1 // pred_region
      %13 = vsyncadd [#allocation3], 0
      %s14 = scalar_lea.hbm %s0, 1
      %s16 = sshll.u32 %s14, 4
      %s17 = int_to_ptr.hbm [resolvable:$true] %s16
      %s18 = sshll.u32 [#allocation2], 4
      %s19 = int_to_ptr.vmem [resolvable:$true] %s18
      %21 = dma.hbm_to_vmem [thread:$0]  %s17, 16, %s19, [#allocation3]
    $region5: #{tpu_custom_call.1} parent=1 // pred_fallthru
      _
    // Predicated region
    $region6: #{tpu_custom_call.1} parent=1 // pred_check
      _
    $region7: #{tpu_custom_call.1} parent=1 // pred_check_branch
      %23 = sbr.rel (0) target = $region9
    $region8: #{tpu_custom_call.1} parent=1 // pred_region
      %25 = vsyncadd [#allocation6], 0
      %s26 = scalar_lea.hbm %s1, 2
      %s28 = sshll.u32 %s26, 4
      %s29 = int_to_ptr.hbm [resolvable:$true] %s28
      %s30 = sshll.u32 [#allocation5], 4
      %s31 = int_to_ptr.vmem [resolvable:$true] %s30
      %33 = dma.hbm_to_vmem [thread:$0]  %s29, 16, %s31, [#allocation6]
    $region9: #{tpu_custom_call.1} parent=1 // pred_fallthru
      _
    // Predicated region
    $region10: #{tpu_custom_call.1} parent=1 // pred_check
      _
    $region11: #{tpu_custom_call.1} parent=1 // pred_check_branch
      %35 = sbr.rel (0) target = $region13
    $region12: #{tpu_custom_call.1} parent=1 // pred_region
      %37 = dma.done [#allocation3], 16
    $region13: #{tpu_custom_call.1} parent=1 // pred_fallthru
      _
    // Predicated region
    $region14: #{tpu_custom_call.1} parent=1 // pred_check
      _
    $region15: #{tpu_custom_call.1} parent=1 // pred_check_branch
      %39 = sbr.rel (0) target = $region17
    $region16: #{tpu_custom_call.1} parent=1 // pred_region
      %41 = dma.done [#allocation6], 16
    $region17: #{tpu_custom_call.1} parent=1 // pred_fallthru
      _
    %v42 = vld [vmem:[#allocation2] sm:$0x1]
    %v43 = vld [vmem:[#allocation5] sm:$0x1]
    %vm44 = vcmp.eq.f32.partialorder %v43, 1.0
    %vm45 = vcmp.eq.f32.partialorder %v42, 1.0
    %vm46 = vmand %vm44, %vm45
    %v47 = vsel %vm46, 1, 0
    %vm48 = vcmask 655360
    %v49 = vsel %vm48, %v47, 2147483648
    %v50 = vand.u32 %v49, 65535
    %v51 = vshra.s32 %v49, 16
    %v52 = vcvt.s32.f32 %v50
    %v53 = vcvt.s32.f32 %v51
    %54 = vmax.xlane.f32.xlu0 %v53
    %v55 = vpop.xlane.xlu0 %54
    %vm56 = vcmp.eq.f32.partialorder %v53, %v55
    %v57 = vsel %vm56, %v52, -inf
    %58 = vmax.xlane.f32.xlu0 %v57
    %v59 = vpop.xlane.xlu0 %58
    %v60 = vcvt.f32.s32 %v59
    %v61 = vcvt.f32.s32 %v55
    %v62 = vshll.u32 %v61, 16
    %v63 = vadd.s32 %v62, %v60
    %vm64 = vcmask 0
    %65 = vst.msk [vmem:[#allocation7] sm:$0x1] %vm64, %v63
    // Predicated region
    $region18: #{tpu_custom_call.1} parent=1 // pred_check
      _
    $region19: #{tpu_custom_call.1} parent=1 // pred_check_branch
      %67 = sbr.rel (0) target = $region21
    $region20: #{tpu_custom_call.1} parent=1 // pred_region
      %69 = vsyncadd [#allocation4], 0
      %s71 = sshll.u32 [#allocation7], 4
      %s72 = int_to_ptr.vmem [resolvable:$true] %s71
      %s73 = sshll.u32 %s2, 4
      %s74 = int_to_ptr.hbm [resolvable:$true] %s73
      %76 = dma.vmem_to_hbm [thread:$0]  %s72, 16, %s74, [#allocation4]
    $region21: #{tpu_custom_call.1} parent=1 // pred_fallthru
      _
    // Predicated region
    $region22: #{tpu_custom_call.1} parent=1 // pred_check
      _
    $region23: #{tpu_custom_call.1} parent=1 // pred_check_branch
      %78 = sbr.rel (0) target = $region25
    $region24: #{tpu_custom_call.1} parent=1 // pred_region
      %80 = dma.done [#allocation4], 16
    $region25: #{tpu_custom_call.1} parent=1 // pred_fallthru
      _
    %81 = vsyncpa [#allocation3], 1
    %82 = vsyncpa [#allocation6], 1
    %83 = vsyncpa [#allocation4], 1

</llo_original>
